<compile_context>
chip_gen: v5e
topology: v5e:2x2
jax: 0.10.0
libtpu: 0.0.40
codegen_flags: <defaults>
</compile_context>

<pallas_src>
import functools

import jax
import jax.numpy as jnp
from jax.experimental import pallas as pl
from jax.experimental.pallas import tpu as pltpu


def _round_up(x, m):
    return (x + m - 1) // m * m


def _cdiv(a, b):
    return (a + b - 1) // b


# ---------------------------------------------------------------------------
# Fast path: whole word table resident in VMEM; gather = one-hot MXU matmul.
# ---------------------------------------------------------------------------
def _onehot_embed_kernel(ids_ref, word_ref, pos_ref, out_ref, *,
                         seq_tile, n_seq_tiles, vocab):
    # ids_ref:  (seq_tile, 1)  int32 VMEM  -- token ids for this tile (pre-clamped)
    # word_ref: (V, D)         f32   VMEM  -- whole word table (resident)
    # pos_ref:  (L_pad, D)     f32   VMEM  -- whole position table (resident)
    # out_ref:  (seq_tile, D)  f32   VMEM
    i = pl.program_id(0)

    ids = ids_ref[...]                                               # (T, 1)
    cols = jax.lax.broadcasted_iota(jnp.int32, (seq_tile, vocab), 1)
    onehot = (cols == ids).astype(word_ref.dtype)                    # (T, V)
    gathered = jnp.dot(onehot, word_ref[...],
                       preferred_element_type=jnp.float32,
                       precision=jax.lax.Precision.HIGHEST)          # (T, D)

    if n_seq_tiles == 1:
        pos_rows = pos_ref[...]
    else:
        pos_base = pl.multiple_of((i % n_seq_tiles) * seq_tile, 8)
        pos_rows = pos_ref[pl.ds(pos_base, seq_tile), :]

    out_ref[...] = gathered + pos_rows


# ---------------------------------------------------------------------------
# Large-vocab path: HBM row gather, double-buffered across grid steps.
# ---------------------------------------------------------------------------
def _hbm_gather_embed_kernel(ids_ref, word_hbm, pos_ref, out_ref,
                             gather_buf, sems, *, seq_tile, n_seq_tiles):
    # ids_ref:    (B*L_pad,)        int32 SMEM (scalar prefetch, pre-clamped)
    # word_hbm:   (V, D)            f32   HBM  (memory_space=pl.ANY)
    # pos_ref:    (L_pad, D)        f32   VMEM (resident: constant index_map)
    # out_ref:    (seq_tile, D)     f32   VMEM
    # gather_buf: (2, seq_tile, D)  f32   VMEM scratch (double buffer)
    # sems:       (2,)              DMA semaphores, one per slot (shared by row copies)
    i = pl.program_id(0)
    n = pl.num_programs(0)
    slot = i % 2

    def issue_row_copies(tile_idx, s):
        base = tile_idx * seq_tile
        for j in range(seq_tile):
            row = ids_ref[base + j]
            pltpu.make_async_copy(word_hbm.at[pl.ds(row, 1)],
                                  gather_buf.at[s, pl.ds(j, 1)],
                                  sems.at[s]).start()

    # Prime the pipeline: the very first tile gathers into its own slot.
    @pl.when(i == 0)
    def _():
        issue_row_copies(0, 0)

    # Prefetch the NEXT tile's rows into the other slot before waiting, so those
    # DMAs overlap this tile's wait + add + writeback (ids are already in SMEM).
    @pl.when(i + 1 < n)
    def _():
        issue_row_copies(i + 1, 1 - slot)

    # Wait for this tile's seq_tile row copies (all signal sems[slot]; each wait
    # descriptor matches one row copy's size).
    for j in range(seq_tile):
        pltpu.make_async_copy(word_hbm.at[pl.ds(0, 1)],
                              gather_buf.at[slot, pl.ds(j, 1)],
                              sems.at[slot]).wait()

    if n_seq_tiles == 1:
        pos_rows = pos_ref[...]
    else:
        pos_base = pl.multiple_of((i % n_seq_tiles) * seq_tile, 8)
        pos_rows = pos_ref[pl.ds(pos_base, seq_tile), :]

    out_ref[...] = gather_buf[slot] + pos_rows


# ---------------------------------------------------------------------------
# Wrapper
# ---------------------------------------------------------------------------
def _choose_seq_tile(batch, seq_len, max_seq_tile):
    l8 = _round_up(seq_len, 8)
    t = min(_round_up(max_seq_tile, 8), l8)
    # Keep >= 2 grid steps when possible so v7x can use both TensorCores.
    if batch * _cdiv(l8, t) < 2 and t >= 16:
        t = _round_up(t // 2, 8)
    # Snug-fit: shrink the tile (keeping 8-alignment) without changing grid length.
    n = _cdiv(l8, t)
    t = _round_up(_cdiv(l8, n), 8)
    return t


def position_embedding_forward(inputs, word_table, pos_table, *,
                               max_seq_tile=256, force_hbm_gather=False):
    """inputs: (B, L) int; word_table: (V, D) f32; pos_table: (S, D) f32, S >= L."""
    B, L = inputs.shape
    V, D = word_table.shape
    S, D2 = pos_table.shape
    assert D == D2, "embedding dims must match"
    assert L <= S, "seq_len exceeds position-embedding table size"

    word_table = word_table.astype(jnp.float32)
    pos_table = pos_table.astype(jnp.float32)

    seq_tile = _choose_seq_tile(B, L, max_seq_tile)
    L_pad = _round_up(L, seq_tile)
    n_seq_tiles = L_pad // seq_tile
    grid = (B * n_seq_tiles,)

    # Clamp out-of-range ids (PyTorch nn.Embedding raises; we clamp instead).
    ids = jnp.clip(inputs.astype(jnp.int32), 0, V - 1)
    if L_pad != L:
        ids = jnp.pad(ids, ((0, 0), (0, L_pad - L)))          # padded tokens -> id 0
    ids_flat = ids.reshape(B * L_pad)

    # Position rows for exactly L_pad positions (padded rows are zeros; their
    # outputs are sliced off at the end).
    if S >= L_pad:
        pos = pos_table[:L_pad]
    else:
        pos = jnp.pad(pos_table, ((0, L_pad - S), (0, 0)))

    small_vocab = (not force_hbm_gather) and V <= 4096 and V * D * 4 <= 4 * 1024 * 1024

    if small_vocab:
        kernel = functools.partial(_onehot_embed_kernel, seq_tile=seq_tile,
                                   n_seq_tiles=n_seq_tiles, vocab=V)
        out_flat = pl.pallas_call(
            kernel,
            out_shape=jax.ShapeDtypeStruct((B * L_pad, D), jnp.float32),
            grid=grid,
            in_specs=[
                pl.BlockSpec((seq_tile, 1), lambda i: (i, 0)),   # token ids
                pl.BlockSpec((V, D), lambda i: (0, 0)),          # word table (resident)
                pl.BlockSpec((L_pad, D), lambda i: (0, 0)),      # pos table (resident)
            ],
            out_specs=pl.BlockSpec((seq_tile, D), lambda i: (i, 0)),
            compiler_params=pltpu.CompilerParams(
                dimension_semantics=("parallel",),
                vmem_limit_bytes=32 * 1024 * 1024),
        )(ids_flat.reshape(B * L_pad, 1), word_table, pos)
    else:
        # All ids are scalar-prefetched into SMEM (padded to a power of two);
        # keep well under SMEM capacity.
        assert B * L_pad <= 32 * 1024, (
            "token count too large for whole-array scalar prefetch")
        # TODO(synk): tile ids through SMEM per grid step for very large B*L.
        kernel = functools.partial(_hbm_gather_embed_kernel, seq_tile=seq_tile,
                                   n_seq_tiles=n_seq_tiles)
        out_flat = pl.pallas_call(
            kernel,
            out_shape=jax.ShapeDtypeStruct((B * L_pad, D), jnp.float32),
            grid_spec=pltpu.PrefetchScalarGridSpec(
                num_scalar_prefetch=1,                               # ids -> SMEM
                grid=grid,
                in_specs=[
                    pl.BlockSpec(memory_space=pl.ANY),               # word table in HBM
                    pl.BlockSpec((L_pad, D), lambda i, ids: (0, 0)), # pos (resident)
                ],
                out_specs=pl.BlockSpec((seq_tile, D), lambda i, ids: (i, 0)),
                scratch_shapes=[
                    pltpu.VMEM((2, seq_tile, D), jnp.float32),       # double buffer
                    pltpu.SemaphoreType.DMA((2,)),                   # one sem per slot
                ],
            ),
            compiler_params=pltpu.CompilerParams(
                # Cross-step double buffering carries state -> keep grid sequential.
                dimension_semantics=("arbitrary",),
                vmem_limit_bytes=32 * 1024 * 1024),
        )(ids_flat, word_table, pos)

    return out_flat.reshape(B, L_pad, D)[:, :L, :]


if __name__ == "__main__":
    key = jax.random.PRNGKey(0)

    def run_case(batch, seq_len, vocab, dim, *, force_hbm_gather=False,
                 max_seq_tile=256):
        k1, k2, k3 = jax.random.split(jax.random.fold_in(key, vocab * 1000 + seq_len), 3)
        word = jax.random.normal(k1, (vocab, dim), jnp.float32)       # nn.Embedding ~ N(0,1)
        pos = jax.random.normal(k2, (seq_len, dim), jnp.float32)
        token_ids = jax.random.randint(k3, (batch, seq_len), 0, vocab, dtype=jnp.int32)

        out = position_embedding_forward(token_ids, word, pos,
                                         max_seq_tile=max_seq_tile,
                                         force_hbm_gather=force_hbm_gather)
        out = jax.block_until_ready(out)

        ref = word[token_ids] + pos[jnp.arange(seq_len)][None]
        assert out.shape == (batch, seq_len, dim)
        assert jnp.allclose(out, ref, atol=1e-5, rtol=1e-5), "mismatch vs reference"

    # 1) Small-vocab fast path (VMEM-resident table, one-hot MXU gather) --
    #    shapes consistent with the PyTorch module's example usage.
    run_case(batch=2, seq_len=8, vocab=32, dim=128)

    # 2) HBM row-gather path, forced so the double-buffered DMA pipeline,
    #    8-aligned padding and dynamic position slicing are also exercised.
    run_case(batch=2, seq_len=40, vocab=64, dim=128,
             force_hbm_gather=True, max_seq_tile=16)

    print("KERNEL_OK")
</pallas_src>

<mosaic_0001>
module attributes {stable_mosaic.version = 11 : i64} {
  func.func @_onehot_embed_kernel(%arg0: i32, %arg1: memref<8x1xi32, #tpu.memory_space<vmem>>, %arg2: memref<32x128xf32, #tpu.memory_space<vmem>>, %arg3: memref<8x128xf32, #tpu.memory_space<vmem>>, %arg4: memref<8x128xf32, #tpu.memory_space<vmem>>) attributes {dimension_semantics = [#tpu.dimension_semantics<parallel>], iteration_bounds = array<i64: 2>, scalar_prefetch = 0 : i64, scratch_operands = 0 : i64, tpu.core_type = #tpu.core_type<tc>, window_params = [{transform_indices = @transform_0, window_bounds = array<i64: 8, 1>}, {pipeline_mode = #tpu.pipeline_mode<synchronous>, transform_indices = @transform_1, window_bounds = array<i64: 32, 128>}, {pipeline_mode = #tpu.pipeline_mode<synchronous>, transform_indices = @transform_2, window_bounds = array<i64: 8, 128>}, {transform_indices = @transform_3, window_bounds = array<i64: 8, 128>}]} {
    %c0 = arith.constant 0 : index
    %c0_0 = arith.constant 0 : index
    %0 = vector.load %arg1[%c0, %c0_0] : memref<8x1xi32, #tpu.memory_space<vmem>>, vector<8x1xi32>
    %1 = tpu.iota {dimensions = array<i32: 1>} : vector<8x32xi32>
    %2 = vector.broadcast %0 : vector<8x1xi32> to vector<8x32xi32>
    %3 = arith.cmpi eq, %1, %2 : vector<8x32xi32>
    %4 = arith.extui %3 : vector<8x32xi1> to vector<8x32xi32>
    %5 = arith.sitofp %4 : vector<8x32xi32> to vector<8x32xf32>
    %c0_1 = arith.constant 0 : index
    %c0_2 = arith.constant 0 : index
    %6 = vector.load %arg2[%c0_1, %c0_2] : memref<32x128xf32, #tpu.memory_space<vmem>>, vector<32x128xf32>
    %cst = arith.constant dense<0.000000e+00> : vector<8x128xf32>
    %7 = tpu.matmul %5, %6, %cst {dimension_numbers = #tpu.dot_dimension_numbers<[1], [0], [0], [1], [0, 0, 1, 1], [], []>, precision = #tpu.contract_precision<fp32>} : vector<8x32xf32>, vector<32x128xf32>, vector<8x128xf32> -> vector<8x128xf32>
    %c0_3 = arith.constant 0 : index
    %c0_4 = arith.constant 0 : index
    %8 = vector.load %arg3[%c0_3, %c0_4] : memref<8x128xf32, #tpu.memory_space<vmem>>, vector<8x128xf32>
    %9 = arith.addf %7, %8 : vector<8x128xf32>
    %c0_5 = arith.constant 0 : index
    %c0_6 = arith.constant 0 : index
    %10 = vector.load %arg4[%c0_5, %c0_6] : memref<8x128xf32, #tpu.memory_space<vmem>>, vector<8x128xf32>
    tpu.vector_store %arg4[%c0_5, %c0_6], %9 {strides = array<i32>} : memref<8x128xf32, #tpu.memory_space<vmem>>, vector<8x128xf32>,
    return
  }
  func.func @transform_0(%arg0: i32) -> (i32, i32) {
    %c0_i32 = arith.constant 0 : i32
    %c0_i32_0 = arith.constant 0 : i32
    return %arg0, %c0_i32 : i32, i32
  }
  func.func @transform_1(%arg0: i32) -> (i32, i32) {
    %c0_i32 = arith.constant 0 : i32
    %c0_i32_0 = arith.constant 0 : i32
    %c0_i32_1 = arith.constant 0 : i32
    return %c0_i32, %c0_i32_0 : i32, i32
  }
  func.func @transform_2(%arg0: i32) -> (i32, i32) {
    %c0_i32 = arith.constant 0 : i32
    %c0_i32_0 = arith.constant 0 : i32
    %c0_i32_1 = arith.constant 0 : i32
    return %c0_i32, %c0_i32_0 : i32, i32
  }
  func.func @transform_3(%arg0: i32) -> (i32, i32) {
    %c0_i32 = arith.constant 0 : i32
    %c0_i32_0 = arith.constant 0 : i32
    return %arg0, %c0_i32 : i32, i32
  }
}

</mosaic_0001>

<llo_original>
// kernel: tpu_custom_call.1
$region0: #{tpu_custom_call.1}
  #allocation0 [shape = 'u32[]', space=smem, size = 0x4, offset = 0x4, fixed_abs, tag = 'smem constant byte address 0x4 - core index']
  #allocation1 [shape = 'u32[72,128]{1,0:T(1,128)}', space=vmem, size = 0x9000, scoped, tag = 'internal scratch']
  %s0 = inlined_call_operand.vmem [shape: s32[16,1], index: 0, kind: input, shape index: {}]
  %s1 = inlined_call_operand.hbm [shape: f32[32,128], index: 1, kind: input, shape index: {}]
  %s2 = inlined_call_operand.vmem [shape: f32[8,128], index: 2, kind: input, shape index: {}]
  %s3 = inlined_call_operand.hbm [shape: f32[16,128], index: 3, kind: output, shape index: {}]
  %s4 = sld [smem:[#allocation0]]
  $region49: #{tpu_custom_call.1} parent=0
    _
  %s6 = ssub.s32 1, %s4
  %s7 = scalar_select 0, %s6, %s4
  $region1: #{tpu_custom_call.1} parent=0
    #allocation2 [shape = 'u8[16384]{0}', space=vmem, size = 0x4000, scoped, tag = 'input window, operand 1, single buffered']
    #allocation3 [shape = 's32[2]{0}', space=sflag, size = 0x8, scoped, tag = 'scoped memory for tpu_custom_call.1']
    #allocation4 [shape = 's32[2]{0}', space=sflag, size = 0x8, scoped, tag = 'scoped memory for tpu_custom_call.1']
    #allocation5 [shape = 'u8[8192]{0}', space=vmem, size = 0x2000, scoped, tag = 'output window, operand 0']
    %8 = vsyncpa [#allocation3], 0
    %9 = vsyncpa [#allocation4], 0
    %s10 = scalar_lea.sflag [#allocation4], 1
    %11 = vsyncpa %s10, 0
    loop: start=0, step=1, limit=4
    $region2: #{tpu_custom_call.1} parent=1 // loop_pre_header
      _
    $region3: #{tpu_custom_call.1} parent=1 // loop_header
      %s13 = sphi 0, %s17
      %p14 = scmp.ge.s32.totalorder %s13, 4
      %s23 = sphi 0, %s25
      %s26 = sphi 0, %s23
      %s27 = sphi 0, %s26
      %s43 = sphi 0, %s27
      %s47 = sphi 0, %s47
      %s49 = sphi 0, %s47
      %s50 = sphi 0, %s49
      %s64 = sphi 0, %s50
      %s68 = sphi 0, %s68
      %s70 = sphi 0, %s68
      %s71 = sphi 0, %s70
      %s85 = sphi 0, %s71
      %s91 = sphi 0, %s93
      %s94 = sphi 0, %s91
      %s95 = sphi 0, %s94
      %s111 = sphi 0, %s95
    $region4: #{tpu_custom_call.1} parent=1 // loop_header_branch
      %16 = sbr.rel (%p14) target = $region8
    $region5: #{tpu_custom_call.1} parent=1 // loop_body
      %s18 = ssub.s32 %s13, 1
      %s19 = ssub.s32 %s13, 2
      %s20 = sadd.s32 %s13, 1
      %s21 = ssub.s32 %s13, %s20
      %p22 = scmp.eq.s32.totalorder %s21, 0
      %s24 = sadd.s32 %s23, 1
      %s25 = scalar_select %p22, %s23, %s24
      %p28 = pneg %p22
      %p29 = scmp.eq.s32.totalorder %s13, 1
      %p30 = por %p28, %p29
      %p31 = scmp.ne.s32.totalorder %s23, %s26
      %p32 = scmp.eq.s32.totalorder %s13, 0
      %p33 = por %p31, %p32
      %p34 = scmp.ne.s32.totalorder %s23, %s26
      %p35 = scmp.eq.s32.totalorder %s18, 1
      %p36 = por %p34, %p35
      %p37 = scmp.ne.s32.totalorder %s26, %s27
      %p38 = scmp.eq.s32.totalorder %s18, 0
      %p39 = por %p37, %p38
      %p40 = scmp.ne.s32.totalorder %s26, %s27
      %p41 = scmp.eq.s32.totalorder %s19, 1
      %p42 = por %p40, %p41
      %p44 = scmp.ne.s32.totalorder %s27, %s43
      %p45 = scmp.eq.s32.totalorder %s19, 0
      %p46 = por %p44, %p45
      %s48 = sadd.s32 %s47, 1
      %p51 = scmp.eq.s32.totalorder %s13, 1
      %p52 = scmp.ne.s32.totalorder %s47, %s49
      %p53 = scmp.eq.s32.totalorder %s13, 0
      %p54 = por %p52, %p53
      %p55 = scmp.ne.s32.totalorder %s47, %s49
      %p56 = scmp.eq.s32.totalorder %s18, 1
      %p57 = por %p55, %p56
      %p58 = scmp.ne.s32.totalorder %s49, %s50
      %p59 = scmp.eq.s32.totalorder %s18, 0
      %p60 = por %p58, %p59
      %p61 = scmp.ne.s32.totalorder %s49, %s50
      %p62 = scmp.eq.s32.totalorder %s19, 1
      %p63 = por %p61, %p62
      %p65 = scmp.ne.s32.totalorder %s50, %s64
      %p66 = scmp.eq.s32.totalorder %s19, 0
      %p67 = por %p65, %p66
      %s69 = sadd.s32 %s68, 1
      %p72 = scmp.eq.s32.totalorder %s13, 1
      %p73 = scmp.ne.s32.totalorder %s68, %s70
      %p74 = scmp.eq.s32.totalorder %s13, 0
      %p75 = por %p73, %p74
      %p76 = scmp.ne.s32.totalorder %s68, %s70
      %p77 = scmp.eq.s32.totalorder %s18, 1
      %p78 = por %p76, %p77
      %p79 = scmp.ne.s32.totalorder %s70, %s71
      %p80 = scmp.eq.s32.totalorder %s18, 0
      %p81 = por %p79, %p80
      %p82 = scmp.ne.s32.totalorder %s70, %s71
      %p83 = scmp.eq.s32.totalorder %s19, 1
      %p84 = por %p82, %p83
      %p86 = scmp.ne.s32.totalorder %s71, %s85
      %p87 = scmp.eq.s32.totalorder %s19, 0
      %p88 = por %p86, %p87
      %s89 = ssub.s32 %s13, %s20
      %p90 = scmp.eq.s32.totalorder %s89, 0
      %s92 = sadd.s32 %s91, 1
      %s93 = scalar_select %p90, %s91, %s92
      %p96 = pneg %p90
      %p97 = scmp.eq.s32.totalorder %s13, 1
      %p98 = por %p96, %p97
      %p99 = scmp.ne.s32.totalorder %s91, %s94
      %p100 = scmp.eq.s32.totalorder %s13, 0
      %p101 = por %p99, %p100
      %p102 = scmp.ne.s32.totalorder %s91, %s94
      %p103 = scmp.eq.s32.totalorder %s18, 1
      %p104 = por %p102, %p103
      %p105 = scmp.ne.s32.totalorder %s94, %s95
      %p106 = scmp.eq.s32.totalorder %s18, 0
      %p107 = por %p105, %p106
      %p108 = scmp.ne.s32.totalorder %s94, %s95
      %p109 = scmp.eq.s32.totalorder %s19, 1
      %p110 = por %p108, %p109
      %p112 = scmp.ne.s32.totalorder %s95, %s111
      %p113 = scmp.eq.s32.totalorder %s19, 0
      %p114 = por %p112, %p113
      %p115 = scmp.le.s32.totalorder 1, %s13
      %p116 = scmp.lt.s32.totalorder %s13, 3
      %p117 = pnand %p115, %p116
      %p118 = pneg %p117
      // Predicated region
      $region9: #{tpu_custom_call.1} parent=5 // pred_check
        _
      $region10: #{tpu_custom_call.1} parent=5 // pred_check_branch
        %120 = sbr.rel (%p117) target = $region12
      $region11: #{tpu_custom_call.1} parent=5 // pred_region
        %s121 = ssub.s32 %s13, 1
        // Predicated region
        $region13: #{tpu_custom_call.1} parent=11 // pred_check
          %p122 = pneg %p60
        $region14: #{tpu_custom_call.1} parent=11 // pred_check_branch
          %124 = sbr.rel (%p122) target = $region16
        $region15: #{tpu_custom_call.1} parent=11 // pred_region
          %126 = vsyncadd [#allocation3], 0
          %s127 = sshll.u32 %s1, 4
          %s128 = int_to_ptr.hbm [resolvable:$true] %s127
          %s129 = sshll.u32 [#allocation2], 4
          %s130 = int_to_ptr.vmem [resolvable:$true] %s129
          %135 = dma.hbm_to_vmem [thread:$0]  %s128, 512, %s130, [#allocation3], 128, 128, 8
        $region16: #{tpu_custom_call.1} parent=11 // pred_fallthru
          _
        // Predicated region
        $region17: #{tpu_custom_call.1} parent=11 // pred_check
          %p136 = pneg %p81
        $region18: #{tpu_custom_call.1} parent=11 // pred_check_branch
          %138 = sbr.rel (%p136) target = $region20
        $region19: #{tpu_custom_call.1} parent=11 // pred_region
          _
        $region20: #{tpu_custom_call.1} parent=11 // pred_fallthru
          _
      $region12: #{tpu_custom_call.1} parent=5 // pred_fallthru
        _
      %p139 = scmp.lt.s32.totalorder %s13, 2
      // Predicated region
      $region21: #{tpu_custom_call.1} parent=5 // pred_check
        %p140 = pneg %p139
      $region22: #{tpu_custom_call.1} parent=5 // pred_check_branch
        %142 = sbr.rel (%p140) target = $region24
      $region23: #{tpu_custom_call.1} parent=5 // pred_region
        // Predicated region
        $region25: #{tpu_custom_call.1} parent=23 // pred_check
          %p143 = pneg %p33
        $region26: #{tpu_custom_call.1} parent=23 // pred_check_branch
          %145 = sbr.rel (%p143) target = $region28
        $region27: #{tpu_custom_call.1} parent=23 // pred_region
          %p146 = scmp.lt.s32.totalorder %s13, 1
          %s147 = scalar_select %p146, %s13, 1
          %s148 = smul.addr %s147, 8
          %s149 = scalar_lea.vmem %s0, %s148
        $region28: #{tpu_custom_call.1} parent=23 // pred_fallthru
          _
      $region24: #{tpu_custom_call.1} parent=5 // pred_fallthru
        _
      %p150 = scmp.le.s32.totalorder 1, %s13
      %p151 = scmp.lt.s32.totalorder %s13, 3
      %p152 = pnand %p150, %p151
      %p153 = pneg %p152
      // Predicated region
      $region29: #{tpu_custom_call.1} parent=5 // pred_check
        _
      $region30: #{tpu_custom_call.1} parent=5 // pred_check_branch
        %155 = sbr.rel (%p152) target = $region32
      $region31: #{tpu_custom_call.1} parent=5 // pred_region
        %s156 = ssub.s32 %s13, 1
        // Predicated region
        $region33: #{tpu_custom_call.1} parent=31 // pred_check
          %p157 = pneg %p60
        $region34: #{tpu_custom_call.1} parent=31 // pred_check_branch
          %159 = sbr.rel (%p157) target = $region36
        $region35: #{tpu_custom_call.1} parent=31 // pred_region
          %161 = dma.done [#allocation3], 512
        $region36: #{tpu_custom_call.1} parent=31 // pred_fallthru
          _
        %p162 = scmp.lt.s32.totalorder %s18, 1
        %s163 = scalar_select %p162, %s18, 1
        %s164 = smul.addr %s163, 8
        %s165 = scalar_lea.vmem %s0, %s164
        %p166 = pneg %p39
        %p167 = pneg %p36
        %p168 = pneg %p60
        %p169 = pneg %p57
        %p170 = pneg %p81
        %p171 = pneg %p78
        %p172 = pneg %p107
        %p173 = pneg %p104
        %s174 = sand.u32 %s94, 1
        %s175 = scalar_lea.sflag [#allocation4], %s174
        %s176 = sand.u32 %s94, 1
        %s177 = smul.addr %s176, 8
        %s178 = scalar_lea.vmem [#allocation5], %s177
        %p179 = scmp.lt.s32.totalorder %s18, 1
        %s180 = scalar_select %p179, %s18, 1
        %s181 = smul.addr %s180, 8
        %s182 = scalar_lea.vmem %s0, %s181
        %v183 = vld [vmem:[%s182] sm:$0xff]
        %v184 = vlaneseq
        %v185 = vand.u32 %v184, 127
        %186 = vset.pattern.permute.xlu0 0
        %187 = vperm.xlu0 %186, %v183
        %v188 = vpop.permute.xlu0 %187
        %vm189 = vcmp.eq.s32.totalorder %v185, %v188
        %v190 = vsel %vm189, 1, 0
        %v191 = vcvt.s32.f32 %v190
        %v192 = vld [vmem:[#allocation2] sm:$0xff]
        %v193 = vld [vmem:[#allocation2 + $0x8] sm:$0xff]
        %v194 = vld [vmem:[#allocation2 + $0x10] sm:$0xff]
        %v195 = vld [vmem:[#allocation2 + $0x18] sm:$0xff]
        %v196 = vld [vmem:[%s2] sm:$0xff]
        %vm197 = vcmask 261120
        %v199 = vsel %vm197, %v191, 0
        %201 = vmatpush.msra.mxu0 0.0
        %202 = vmatpush.msra.mxu0 0.0
        %203 = vmatpush.msra.mxu0 0.0
        %204 = vmatpush.msra.mxu0 0.0
        %205 = vmatpush.msra.mxu0 0.0
        %206 = vmatpush.msra.mxu0 0.0
        %207 = vmatpush.msra.mxu0 0.0
        %208 = vmatpush.msra.mxu0 0.0
        %209 = vmatpush.msra.mxu0 0.0
        %210 = vmatpush.msra.mxu0 0.0
        %211 = vmatpush.msra.mxu0 0.0
        %212 = vmatpush.msra.mxu0 0.0
        %v213 = vand.u32 %v195, 4294901760
        %214 = vmatpush.msra.mxu0 %v213
        %v215 = vand.u32 %v194, 4294901760
        %216 = vmatpush.msra.mxu0 %v215
        %v217 = vand.u32 %v193, 4294901760
        %218 = vmatpush.msra.mxu0 %v217
        %v219 = vand.u32 %v192, 4294901760
        %220 = vmatpush.msra.mxu0 %v219
        %v221 = vand.u32 %v199, 4294901760
        %v222 = vsub.f32 %v199, %v221
        %v223 = vand.u32 %v222, 4294901760
        %v224 = vsub.f32 %v222, %v223
        %v225 = vand.u32 %v224, 4294901760
        %226 = vmatmul.f32.gmra.mxu0 %v225
        %v227 = vpop.f32.mrf.mxu0
        %v228 = vadd.f32 %v196, %v227
        %229 = vdwg.mxu0
        %230 = vmatpush.msra.mxu0 0.0
        %231 = vmatpush.msra.mxu0 0.0
        %232 = vmatpush.msra.mxu0 0.0
        %233 = vmatpush.msra.mxu0 0.0
        %234 = vmatpush.msra.mxu0 0.0
        %235 = vmatpush.msra.mxu0 0.0
        %236 = vmatpush.msra.mxu0 0.0
        %237 = vmatpush.msra.mxu0 0.0
        %238 = vmatpush.msra.mxu0 0.0
        %239 = vmatpush.msra.mxu0 0.0
        %240 = vmatpush.msra.mxu0 0.0
        %241 = vmatpush.msra.mxu0 0.0
        %v242 = vand.u32 %v195, 4294901760
        %v243 = vsub.f32 %v195, %v242
        %v244 = vand.u32 %v243, 4294901760
        %v245 = vsub.f32 %v243, %v244
        %v246 = vand.u32 %v245, 4294901760
        %247 = vmatpush.msra.mxu0 %v246
        %v248 = vand.u32 %v194, 4294901760
        %v249 = vsub.f32 %v194, %v248
        %v250 = vand.u32 %v249, 4294901760
        %v251 = vsub.f32 %v249, %v250
        %v252 = vand.u32 %v251, 4294901760
        %253 = vmatpush.msra.mxu0 %v252
        %v254 = vand.u32 %v193, 4294901760
        %v255 = vsub.f32 %v193, %v254
        %v256 = vand.u32 %v255, 4294901760
        %v257 = vsub.f32 %v255, %v256
        %v258 = vand.u32 %v257, 4294901760
        %259 = vmatpush.msra.mxu0 %v258
        %v260 = vand.u32 %v192, 4294901760
        %v261 = vsub.f32 %v192, %v260
        %v262 = vand.u32 %v261, 4294901760
        %v263 = vsub.f32 %v261, %v262
        %v264 = vand.u32 %v263, 4294901760
        %265 = vmatpush.msra.mxu0 %v264
        %v266 = vand.u32 %v199, 4294901760
        %267 = vmatmul.f32.gmra.mxu0 %v266
        %v268 = vpop.f32.mrf.mxu0
        %v269 = vadd.f32 %v228, %v268
        %270 = vdwg.mxu0
        %271 = vmatpush.msra.mxu0 0.0
        %272 = vmatpush.msra.mxu0 0.0
        %273 = vmatpush.msra.mxu0 0.0
        %274 = vmatpush.msra.mxu0 0.0
        %275 = vmatpush.msra.mxu0 0.0
        %276 = vmatpush.msra.mxu0 0.0
        %277 = vmatpush.msra.mxu0 0.0
        %278 = vmatpush.msra.mxu0 0.0
        %279 = vmatpush.msra.mxu0 0.0
        %280 = vmatpush.msra.mxu0 0.0
        %281 = vmatpush.msra.mxu0 0.0
        %282 = vmatpush.msra.mxu0 0.0
        %v283 = vand.u32 %v195, 4294901760
        %v284 = vsub.f32 %v195, %v283
        %285 = vmatpush.msra.mxu0 %v284
        %v286 = vand.u32 %v194, 4294901760
        %v287 = vsub.f32 %v194, %v286
        %288 = vmatpush.msra.mxu0 %v287
        %v289 = vand.u32 %v193, 4294901760
        %v290 = vsub.f32 %v193, %v289
        %291 = vmatpush.msra.mxu0 %v290
        %v292 = vand.u32 %v192, 4294901760
        %v293 = vsub.f32 %v192, %v292
        %294 = vmatpush.msra.mxu0 %v293
        %v295 = vand.u32 %v199, 4294901760
        %v296 = vsub.f32 %v199, %v295
        %297 = vmatmul.f32.gmra.mxu0 %v296
        %v298 = vpop.f32.mrf.mxu0
        %v299 = vadd.f32 %v269, %v298
        %300 = vdwg.mxu0
        %301 = vmatpush.msra.mxu0 0.0
        %302 = vmatpush.msra.mxu0 0.0
        %303 = vmatpush.msra.mxu0 0.0
        %304 = vmatpush.msra.mxu0 0.0
        %305 = vmatpush.msra.mxu0 0.0
        %306 = vmatpush.msra.mxu0 0.0
        %307 = vmatpush.msra.mxu0 0.0
        %308 = vmatpush.msra.mxu0 0.0
        %309 = vmatpush.msra.mxu0 0.0
        %310 = vmatpush.msra.mxu0 0.0
        %311 = vmatpush.msra.mxu0 0.0
        %312 = vmatpush.msra.mxu0 0.0
        %v313 = vand.u32 %v195, 4294901760
        %314 = vmatpush.msra.mxu0 %v313
        %v315 = vand.u32 %v194, 4294901760
        %316 = vmatpush.msra.mxu0 %v315
        %v317 = vand.u32 %v193, 4294901760
        %318 = vmatpush.msra.mxu0 %v317
        %v319 = vand.u32 %v192, 4294901760
        %320 = vmatpush.msra.mxu0 %v319
        %v321 = vand.u32 %v199, 4294901760
        %v322 = vsub.f32 %v199, %v321
        %v323 = vand.u32 %v322, 4294901760
        %324 = vmatmul.f32.gmra.mxu0 %v323
        %v325 = vpop.f32.mrf.mxu0
        %v326 = vadd.f32 %v299, %v325
        %327 = vdwg.mxu0
        %328 = vmatpush.msra.mxu0 0.0
        %329 = vmatpush.msra.mxu0 0.0
        %330 = vmatpush.msra.mxu0 0.0
        %331 = vmatpush.msra.mxu0 0.0
        %332 = vmatpush.msra.mxu0 0.0
        %333 = vmatpush.msra.mxu0 0.0
        %334 = vmatpush.msra.mxu0 0.0
        %335 = vmatpush.msra.mxu0 0.0
        %336 = vmatpush.msra.mxu0 0.0
        %337 = vmatpush.msra.mxu0 0.0
        %338 = vmatpush.msra.mxu0 0.0
        %339 = vmatpush.msra.mxu0 0.0
        %v340 = vand.u32 %v195, 4294901760
        %v341 = vsub.f32 %v195, %v340
        %v342 = vand.u32 %v341, 4294901760
        %343 = vmatpush.msra.mxu0 %v342
        %v344 = vand.u32 %v194, 4294901760
        %v345 = vsub.f32 %v194, %v344
        %v346 = vand.u32 %v345, 4294901760
        %347 = vmatpush.msra.mxu0 %v346
        %v348 = vand.u32 %v193, 4294901760
        %v349 = vsub.f32 %v193, %v348
        %v350 = vand.u32 %v349, 4294901760
        %351 = vmatpush.msra.mxu0 %v350
        %v352 = vand.u32 %v192, 4294901760
        %v353 = vsub.f32 %v192, %v352
        %v354 = vand.u32 %v353, 4294901760
        %355 = vmatpush.msra.mxu0 %v354
        %v356 = vand.u32 %v199, 4294901760
        %357 = vmatmul.f32.gmra.mxu0 %v356
        %v358 = vpop.f32.mrf.mxu0
        %v359 = vadd.f32 %v326, %v358
        %360 = vdwg.mxu0
        %361 = vmatpush.msra.mxu0 0.0
        %362 = vmatpush.msra.mxu0 0.0
        %363 = vmatpush.msra.mxu0 0.0
        %364 = vmatpush.msra.mxu0 0.0
        %365 = vmatpush.msra.mxu0 0.0
        %366 = vmatpush.msra.mxu0 0.0
        %367 = vmatpush.msra.mxu0 0.0
        %368 = vmatpush.msra.mxu0 0.0
        %369 = vmatpush.msra.mxu0 0.0
        %370 = vmatpush.msra.mxu0 0.0
        %371 = vmatpush.msra.mxu0 0.0
        %372 = vmatpush.msra.mxu0 0.0
        %v373 = vand.u32 %v195, 4294901760
        %374 = vmatpush.msra.mxu0 %v373
        %v375 = vand.u32 %v194, 4294901760
        %376 = vmatpush.msra.mxu0 %v375
        %v377 = vand.u32 %v193, 4294901760
        %378 = vmatpush.msra.mxu0 %v377
        %v379 = vand.u32 %v192, 4294901760
        %380 = vmatpush.msra.mxu0 %v379
        %v381 = vand.u32 %v199, 4294901760
        %382 = vmatmul.f32.gmra.mxu0 %v381
        %v383 = vpop.f32.mrf.mxu0
        %v384 = vadd.f32 %v359, %v383
        %385 = vdwg.mxu0
        %386 = vst [vmem:[%s178] sm:$0xff] %v384
        %s387 = sand.u32 %s94, 1
        %s388 = scalar_lea.sflag [#allocation4], %s387
        %s389 = sand.u32 %s94, 1
        %s390 = smul.addr %s389, 8
        %s391 = scalar_lea.vmem [#allocation5], %s390
        // Predicated region
        $region37: #{tpu_custom_call.1} parent=31 // pred_check
          %p392 = pneg %p104
        $region38: #{tpu_custom_call.1} parent=31 // pred_check_branch
          %394 = sbr.rel (%p392) target = $region40
        $region39: #{tpu_custom_call.1} parent=31 // pred_region
          %396 = vsyncadd %s388, 0
          %s397 = smul.addr %s18, 8
          %s398 = scalar_lea.hbm %s3, %s397
          %s400 = sshll.u32 %s391, 4
          %s401 = int_to_ptr.vmem [resolvable:$true] %s400
          %s402 = sshll.u32 %s398, 4
          %s403 = int_to_ptr.hbm [resolvable:$true] %s402
          %405 = dma.vmem_to_hbm [thread:$0]  %s401, 128, %s403, %s388
        $region40: #{tpu_custom_call.1} parent=31 // pred_fallthru
          _
      $region32: #{tpu_custom_call.1} parent=5 // pred_fallthru
        _
      %p406 = scmp.le.s32.totalorder 2, %s13
      // Predicated region
      $region41: #{tpu_custom_call.1} parent=5 // pred_check
        %p407 = pneg %p406
      $region42: #{tpu_custom_call.1} parent=5 // pred_check_branch
        %409 = sbr.rel (%p407) target = $region44
      $region43: #{tpu_custom_call.1} parent=5 // pred_region
        %s410 = ssub.s32 %s13, 2
        // Predicated region
        $region45: #{tpu_custom_call.1} parent=43 // pred_check
          %p411 = pneg %p110
        $region46: #{tpu_custom_call.1} parent=43 // pred_check_branch
          %413 = sbr.rel (%p411) target = $region48
        $region47: #{tpu_custom_call.1} parent=43 // pred_region
          %s414 = sand.u32 %s95, 1
          %s415 = scalar_lea.sflag [#allocation4], %s414
          %s416 = sand.u32 %s95, 1
          %s417 = smul.addr %s416, 8
          %s418 = scalar_lea.vmem [#allocation5], %s417
          %420 = dma.done %s415, 128
        $region48: #{tpu_custom_call.1} parent=43 // pred_fallthru
          _
      $region44: #{tpu_custom_call.1} parent=5 // pred_fallthru
        _
    $region6: #{tpu_custom_call.1} parent=1 // loop_footer
      %s17 = sadd.s32 1, %s13
    $region7: #{tpu_custom_call.1} parent=1 // loop_footer_branch
      %12 = sbr.rel target = $region3
    $region8: #{tpu_custom_call.1} parent=1 // loop_exit
      _
    %421 = vsyncpa [#allocation3], 1
    %s422 = scalar_lea.sflag [#allocation3], 1
    %423 = vsyncpa %s422, 1
    %424 = vsyncpa [#allocation4], 1
    %s425 = scalar_lea.sflag [#allocation4], 1
    %426 = vsyncpa %s425, 1

</llo_original>
